<compile_context>
chip_gen: v7x
topology: tpu7x:2x2x1
jax: 0.10.0
libtpu: 0.0.40
codegen_flags: <defaults>
</compile_context>

<pallas_src>
import jax
import jax.numpy as jnp
from jax import lax
from jax.experimental import pallas as pl
from jax.experimental.pallas import tpu as pltpu

P_DROP = 0.6
KEEP_SCALE = 1.0 / (1.0 - P_DROP)                 # 2.5
_KEEP_THRESH = int(round(P_DROP * (1 << 24)))     # drop if 24-bit uniform < thresh

_MAX_BLOCK_ROWS = 2048   # 2048 x 512 x 4 B = 4 MiB per block buffer

# murmur3 fmix32 constants / seed salt, stored as *Python ints* in signed
# int32 range (created as jnp constants only inside the kernel trace).
_C1 = 0x85EBCA6B - (1 << 32)         # -2049891733
_C2 = 0xC2B2AE35 - (1 << 32)         # -1028477387
_SEED_SALT = 0x9E3779B9 - (1 << 32)  # -1640531527


def _round_up(v, m):
    return ((v + m - 1) // m) * m


def _dropout_kernel(seed_ref, x_ref, o_ref):
    blk_rows, blk_cols = x_ref.shape

    # Per-block scalar offset (sreg arithmetic, once per grid step).
    base = pl.program_id(0) * (blk_rows * blk_cols)

    row = lax.broadcasted_iota(jnp.int32, (blk_rows, blk_cols), 0)
    col = lax.broadcasted_iota(jnp.int32, (blk_rows, blk_cols), 1)
    if blk_cols & (blk_cols - 1) == 0:           # power of two -> shift
        shift = blk_cols.bit_length() - 1
        gidx = base + lax.shift_left(row, jnp.int32(shift)) + col
    else:
        gidx = base + row * blk_cols + col

    # Single-round murmur3 fmix32 of (global index ^ salted seed).
    h = gidx ^ (seed_ref[0] + jnp.int32(_SEED_SALT))
    h = h ^ lax.shift_right_logical(h, jnp.int32(16))
    h = h * jnp.int32(_C1)
    h = h ^ lax.shift_right_logical(h, jnp.int32(13))
    h = h * jnp.int32(_C2)
    h = h ^ lax.shift_right_logical(h, jnp.int32(16))

    # Integer-threshold Bernoulli: 24-bit uniform, keep with prob 1 - P_DROP.
    r = lax.shift_right_logical(h, jnp.int32(8))
    keep = r >= jnp.int32(_KEEP_THRESH)

    x = x_ref[...]
    scale = jnp.asarray(KEEP_SCALE, dtype=x.dtype)   # scale in native dtype
    o_ref[...] = jnp.where(keep, x * scale, jnp.zeros_like(x))


def dropout_pallas(x, seed=0):
    """Dropout(p=0.6, training=True) via a tiled, lane-dense Pallas TPU kernel."""
    orig_shape = x.shape
    n = x.size
    dtype = x.dtype

    # Lane-dense column count: prefer a multiple of 128 that divides n exactly
    # so no pad/concat (extra HBM pass) is needed.
    cols = None
    for c in (512, 256, 128):
        if n % c == 0:
            cols = c
            break

    flat = x.reshape(-1)
    pad = 0
    if cols is None:
        # TODO(synk): sizes not divisible by 128 take a pad+slice path
        # (one extra HBM read+write); could be handled with pl.BoundedSlice.
        cols = 512
        pad = (-n) % cols
        flat = jnp.concatenate([flat, jnp.zeros((pad,), dtype)])

    rows = flat.size // cols
    x2 = flat.reshape(rows, cols)

    if rows <= 8:
        block_rows = rows                         # full-extent block is always legal
    else:
        # >= 2 grid steps so v7x's two TensorCores can split the rows;
        # cap per-buffer size at 4 MiB for v7x's smaller VMEM.
        block_rows = min(_MAX_BLOCK_ROWS, _round_up(pl.cdiv(rows, 2), 8))
    grid = (pl.cdiv(rows, block_rows),)

    seed_arr = jnp.asarray([seed], dtype=jnp.int32)

    out = pl.pallas_call(
        _dropout_kernel,
        out_shape=jax.ShapeDtypeStruct((rows, cols), dtype),
        grid_spec=pltpu.PrefetchScalarGridSpec(
            num_scalar_prefetch=1,
            grid=grid,
            in_specs=[pl.BlockSpec((block_rows, cols), lambda i, seed_ref: (i, 0))],
            out_specs=pl.BlockSpec((block_rows, cols), lambda i, seed_ref: (i, 0)),
        ),
        compiler_params=pltpu.CompilerParams(
            dimension_semantics=("parallel",),     # v7x: shard rows across 2 TCs
            vmem_limit_bytes=32 * 1024 * 1024,     # explicit (v5e default is 16 MiB)
        ),
    )(seed_arr, x2)

    flat_out = out.reshape(-1)
    if pad:
        flat_out = flat_out[:n]
    return flat_out.reshape(orig_shape)


def drop_attr5_forward(x, adj, seed=0):
    """Mirrors Drop_attr5.forward(x, adj) -> (dropout(x, p=0.6), adj)."""
    # TODO(synk): torch uses its global RNG for the mask; here the mask comes
    # from a counter-based hash PRNG with the same Bernoulli(0.4) statistics.
    return dropout_pallas(x, seed), adj


if __name__ == "__main__":
    key = jax.random.PRNGKey(0)
    kx, kadj = jax.random.split(key)

    # Small shapes consistent with the module's usage (graph features + adjacency).
    x = jax.random.normal(kx, (2, 4, 16, 16), dtype=jnp.float32)
    adj = jax.random.normal(kadj, (16, 16), dtype=jnp.float32)

    y, adj_out = drop_attr5_forward(x, adj, seed=0)
    jax.block_until_ready(y)
    jax.block_until_ready(adj_out)

    # Sanity: shape/dtype preserved, adj untouched, survivors scaled by exactly 2.5,
    # keep fraction roughly 1 - p = 0.4.
    assert y.shape == x.shape and y.dtype == x.dtype
    assert bool(jnp.all(adj_out == adj))

    nonzero = y != 0
    ratio = jnp.where(nonzero, y / jnp.where(x == 0, 1.0, x), KEEP_SCALE)
    assert bool(jnp.all(jnp.abs(ratio - KEEP_SCALE) < 1e-5))

    keep_frac = float(jnp.mean(nonzero.astype(jnp.float32)))
    assert 0.2 < keep_frac < 0.6, keep_frac

    print("KERNEL_OK")
</pallas_src>

<mosaic_0001>
module attributes {stable_mosaic.version = 11 : i64} {
  func.func @_dropout_kernel(%arg0: i32, %arg1: memref<1xi32, #tpu.memory_space<smem>>, %arg2: memref<4x512xf32, #tpu.memory_space<vmem>>, %arg3: memref<4x512xf32, #tpu.memory_space<vmem>>) attributes {dimension_semantics = [#tpu.dimension_semantics<parallel>], iteration_bounds = array<i64: 1>, scalar_prefetch = 1 : i64, scratch_operands = 0 : i64, tpu.core_type = #tpu.core_type<tc>, window_params = [{transform_indices = @transform_0, window_bounds = array<i64: 4, 512>}, {transform_indices = @transform_1, window_bounds = array<i64: 4, 512>}]} {
    %c2048_i32 = arith.constant 2048 : i32
    %0 = arith.muli %arg0, %c2048_i32 : i32
    %1 = tpu.iota {dimensions = array<i32: 0>} : vector<4x512xi32>
    %2 = tpu.iota {dimensions = array<i32: 1>} : vector<4x512xi32>
    %c9_i32 = arith.constant 9 : i32
    %3 = vector.broadcast %c9_i32 : i32 to vector<4x512xi32>
    %4 = arith.shli %1, %3 : vector<4x512xi32>
    %5 = vector.broadcast %0 : i32 to vector<4x512xi32>
    %6 = arith.addi %5, %4 : vector<4x512xi32>
    %7 = arith.addi %6, %2 : vector<4x512xi32>
    %c0 = arith.constant 0 : index
    %8 = memref.load %arg1[%c0] : memref<1xi32, #tpu.memory_space<smem>>
    %c-1640531527_i32 = arith.constant -1640531527 : i32
    %9 = arith.addi %8, %c-1640531527_i32 : i32
    %10 = vector.broadcast %9 : i32 to vector<4x512xi32>
    %11 = arith.xori %7, %10 : vector<4x512xi32>
    %c16_i32 = arith.constant 16 : i32
    %12 = vector.broadcast %c16_i32 : i32 to vector<4x512xi32>
    %13 = arith.shrui %11, %12 : vector<4x512xi32>
    %14 = arith.xori %11, %13 : vector<4x512xi32>
    %c-2048144789_i32 = arith.constant -2048144789 : i32
    %15 = vector.broadcast %c-2048144789_i32 : i32 to vector<4x512xi32>
    %16 = arith.muli %14, %15 : vector<4x512xi32>
    %c13_i32 = arith.constant 13 : i32
    %17 = vector.broadcast %c13_i32 : i32 to vector<4x512xi32>
    %18 = arith.shrui %16, %17 : vector<4x512xi32>
    %19 = arith.xori %16, %18 : vector<4x512xi32>
    %c-1028477387_i32 = arith.constant -1028477387 : i32
    %20 = vector.broadcast %c-1028477387_i32 : i32 to vector<4x512xi32>
    %21 = arith.muli %19, %20 : vector<4x512xi32>
    %c16_i32_0 = arith.constant 16 : i32
    %22 = vector.broadcast %c16_i32_0 : i32 to vector<4x512xi32>
    %23 = arith.shrui %21, %22 : vector<4x512xi32>
    %24 = arith.xori %21, %23 : vector<4x512xi32>
    %c8_i32 = arith.constant 8 : i32
    %25 = vector.broadcast %c8_i32 : i32 to vector<4x512xi32>
    %26 = arith.shrui %24, %25 : vector<4x512xi32>
    %c10066330_i32 = arith.constant 10066330 : i32
    %27 = vector.broadcast %c10066330_i32 : i32 to vector<4x512xi32>
    %28 = arith.cmpi sge, %26, %27 : vector<4x512xi32>
    %c0_1 = arith.constant 0 : index
    %c0_2 = arith.constant 0 : index
    %29 = vector.load %arg2[%c0_1, %c0_2] : memref<4x512xf32, #tpu.memory_space<vmem>>, vector<4x512xf32>
    %cst = arith.constant 2.500000e+00 : f32
    %30 = vector.broadcast %cst : f32 to vector<4x512xf32>
    %31 = arith.mulf %29, %30 : vector<4x512xf32>
    %cst_3 = arith.constant 0.000000e+00 : f32
    %32 = vector.broadcast %cst_3 : f32 to vector<4x512xf32>
    %33 = arith.select %28, %31, %32 : vector<4x512xi1>, vector<4x512xf32>
    %c0_4 = arith.constant 0 : index
    %c0_5 = arith.constant 0 : index
    %34 = vector.load %arg3[%c0_4, %c0_5] : memref<4x512xf32, #tpu.memory_space<vmem>>, vector<4x512xf32>
    tpu.vector_store %arg3[%c0_4, %c0_5], %33 {strides = array<i32>} : memref<4x512xf32, #tpu.memory_space<vmem>>, vector<4x512xf32>,
    return
  }
  func.func @transform_0(%arg0: i32, %arg1: memref<1xi32, #tpu.memory_space<smem>>) -> (i32, i32) {
    %c0_i32 = arith.constant 0 : i32
    %c0_i32_0 = arith.constant 0 : i32
    return %arg0, %c0_i32 : i32, i32
  }
  func.func @transform_1(%arg0: i32, %arg1: memref<1xi32, #tpu.memory_space<smem>>) -> (i32, i32) {
    %c0_i32 = arith.constant 0 : i32
    %c0_i32_0 = arith.constant 0 : i32
    return %arg0, %c0_i32 : i32, i32
  }
}

</mosaic_0001>

<llo_original>
// kernel: tpu_custom_call.1
$region0: #{tpu_custom_call.1}
  #allocation0 [shape = 'u32[]', space=smem, size = 0x4, offset = 0x4, fixed_abs, tag = 'smem constant byte address 0x4 - core index']
  #allocation1 [shape = 'u32[144,128]{1,0:T(1,128)}', space=vmem, size = 0x12000, scoped, tag = 'internal scratch']
  #allocation2 [shape = 's32[1]{0}', space=sflag, size = 0x4, scoped, tag = 'scoped memory for tpu_custom_call.1']
  #allocation3 [shape = 's32[1]{0:T(128)S(6)}', space=smem, size = 0x200, scoped, tag = 'prefetched SMEM operand 0']
  %s0 = inlined_call_operand.<no memory space> [shape: s32[1], index: 0, kind: input, shape index: {}]
  %s1 = inlined_call_operand.hbm [shape: f32[4,512], index: 1, kind: input, shape index: {}]
  %s2 = inlined_call_operand.hbm [shape: f32[4,512], index: 2, kind: output, shape index: {}]
  %s3 = sld [smem:[#allocation0]]
  $region18: #{tpu_custom_call.1} parent=0
    _
  %s5 = ssub.s32 1, %s3
  %s6 = scalar_select 0, %s5, %s3
  %7 = sst [smem:[#allocation3]] %s0
  $region1: #{tpu_custom_call.1} parent=0
    #allocation4 [shape = 'u8[8192]{0}', space=vmem, size = 0x2000, scoped, tag = 'input window, operand 1, single buffered']
    #allocation5 [shape = 's32[1]{0}', space=sflag, size = 0x4, scoped, tag = 'scoped memory for tpu_custom_call.1']
    #allocation6 [shape = 's32[1]{0}', space=sflag, size = 0x4, scoped, tag = 'scoped memory for tpu_custom_call.1']
    #allocation7 [shape = 'u8[8192]{0}', space=vmem, size = 0x2000, scoped, tag = 'output window, operand 0, single buffered']
    %8 = vsyncpa [#allocation5], 0
    %9 = vsyncpa [#allocation6], 0
    // Predicated region
    $region2: #{tpu_custom_call.1} parent=1 // pred_check
      _
    $region3: #{tpu_custom_call.1} parent=1 // pred_check_branch
      %11 = sbr.rel (0) target = $region5
    $region4: #{tpu_custom_call.1} parent=1 // pred_region
      %s13 = ssub.s32 256, 256
      %14 = vsyncadd [#allocation5], %s13
      %s16 = sshll.u32 [#allocation4], 4
      %s17 = int_to_ptr.vmem [resolvable:$true] %s16
      %19 = dma.hbm_to_vmem [thread:$0]  %s1, 256, %s17, [#allocation5]
    $region5: #{tpu_custom_call.1} parent=1 // pred_fallthru
      _
    // Predicated region
    $region6: #{tpu_custom_call.1} parent=1 // pred_check
      _
    $region7: #{tpu_custom_call.1} parent=1 // pred_check_branch
      %21 = sbr.rel (0) target = $region9
    $region8: #{tpu_custom_call.1} parent=1 // pred_region
      %22 = dma.done [#allocation5], 256
    $region9: #{tpu_custom_call.1} parent=1 // pred_fallthru
      _
    %s23 = smul.u32 0, 2048
    %v24 = vlaneseq
    %v25 = vshrl.u32 %v24, 7
    %v26 = vlaneseq
    %v27 = vand.u32 %v26, 127
    %v28 = vadd.s32 %v27, 128
    %v29 = vadd.s32 %v27, 256
    %v30 = vadd.s32 %v27, 384
    %v31 = vshll.u32 %v25, 9
    %v32 = vstv %s23
    %v33 = vadd.s32 %v32, %v31
    %v34 = vadd.s32 %v33, %v27
    %v35 = vadd.s32 %v33, %v28
    %v36 = vadd.s32 %v33, %v29
    %v37 = vadd.s32 %v33, %v30
    %s38 = sld [smem:[#allocation3]]
    %s39 = sadd.s32 %s38, 2654435769
    %v40 = vstv %s39
    %v41 = vxor.u32 %v34, %v40
    %v42 = vxor.u32 %v35, %v40
    %v43 = vxor.u32 %v36, %v40
    %v44 = vxor.u32 %v37, %v40
    %v45 = vshrl.u32 %v41, 16
    %v46 = vshrl.u32 %v42, 16
    %v47 = vshrl.u32 %v43, 16
    %v48 = vshrl.u32 %v44, 16
    %v49 = vxor.u32 %v41, %v45
    %v50 = vxor.u32 %v42, %v46
    %v51 = vxor.u32 %v43, %v47
    %v52 = vxor.u32 %v44, %v48
    %v53 = vmul.u32 %v49, 2246822507
    %v54 = vmul.u32 %v50, 2246822507
    %v55 = vmul.u32 %v51, 2246822507
    %v56 = vmul.u32 %v52, 2246822507
    %v57 = vshrl.u32 %v53, 13
    %v58 = vshrl.u32 %v54, 13
    %v59 = vshrl.u32 %v55, 13
    %v60 = vshrl.u32 %v56, 13
    %v61 = vxor.u32 %v53, %v57
    %v62 = vxor.u32 %v54, %v58
    %v63 = vxor.u32 %v55, %v59
    %v64 = vxor.u32 %v56, %v60
    %v65 = vmul.u32 %v61, 3266489909
    %v66 = vmul.u32 %v62, 3266489909
    %v67 = vmul.u32 %v63, 3266489909
    %v68 = vmul.u32 %v64, 3266489909
    %v69 = vshrl.u32 %v65, 16
    %v70 = vshrl.u32 %v66, 16
    %v71 = vshrl.u32 %v67, 16
    %v72 = vshrl.u32 %v68, 16
    %v73 = vxor.u32 %v65, %v69
    %v74 = vxor.u32 %v66, %v70
    %v75 = vxor.u32 %v67, %v71
    %v76 = vxor.u32 %v68, %v72
    %v77 = vshrl.u32 %v73, 8
    %v78 = vshrl.u32 %v74, 8
    %v79 = vshrl.u32 %v75, 8
    %v80 = vshrl.u32 %v76, 8
    %vm81 = vcmp.ge.s32.totalorder %v77, 10066330
    %vm82 = vcmp.ge.s32.totalorder %v78, 10066330
    %vm83 = vcmp.ge.s32.totalorder %v79, 10066330
    %vm84 = vcmp.ge.s32.totalorder %v80, 10066330
    %v85 = vld [vmem:[#allocation4] sm:$0xff]
    %v86 = vld [vmem:[#allocation4 + $0x8] sm:$0xff]
    %v87 = vmul.f32 %v85, 2.5
    %v88 = vmul.f32 %v86, 2.5
    %v91 = vcombine.high %v87, %v87
    %v92 = vcombine.high %v88, %v88
    %v95 = vsel %vm81, %v87, 0.0
    %v96 = vsel %vm82, %v91, 0.0
    %v97 = vsel %vm83, %v88, 0.0
    %v98 = vsel %vm84, %v92, 0.0
    %v103 = vcombine.low %v95, %v96
    %v104 = vcombine.low %v97, %v98
    %107 = vst [vmem:[#allocation7] sm:$0xff] %v103
    %108 = vst [vmem:[#allocation7 + $0x8] sm:$0xff] %v104
    // Predicated region
    $region10: #{tpu_custom_call.1} parent=1 // pred_check
      _
    $region11: #{tpu_custom_call.1} parent=1 // pred_check_branch
      %110 = sbr.rel (0) target = $region13
    $region12: #{tpu_custom_call.1} parent=1 // pred_region
      %s112 = ssub.s32 256, 256
      %113 = vsyncadd [#allocation6], %s112
      %s115 = sshll.u32 [#allocation7], 4
      %s116 = int_to_ptr.vmem [resolvable:$true] %s115
      %118 = dma.vmem_to_hbm [thread:$0]  %s116, 256, %s2, [#allocation6]
    $region13: #{tpu_custom_call.1} parent=1 // pred_fallthru
      _
    // Predicated region
    $region14: #{tpu_custom_call.1} parent=1 // pred_check
      _
    $region15: #{tpu_custom_call.1} parent=1 // pred_check_branch
      %120 = sbr.rel (0) target = $region17
    $region16: #{tpu_custom_call.1} parent=1 // pred_region
      %121 = dma.done [#allocation6], 256
    $region17: #{tpu_custom_call.1} parent=1 // pred_fallthru
      _
    %122 = vsyncpa [#allocation5], 1
    %123 = vsyncpa [#allocation6], 1

</llo_original>
